<compile_context>
chip_gen: v6e
topology: v6e:2x2x1
jax: 0.10.0
libtpu: 0.0.40
codegen_flags: <defaults>
</compile_context>

<pallas_src>
import functools

import jax
import jax.numpy as jnp
from jax.experimental import pallas as pl
from jax.experimental.pallas import tpu as pltpu


IN_FEATS = 196          # 14 * 14
IN_PAD = 256            # 196 padded to a multiple of 128 (also native MXU tile)
LATENT = 5
LATENT_PAD = 8          # 5 padded to a multiple of 8
MAX_TB = 2048           # batch tile upper bound (well under scoped-VMEM limits)


def _round_up(n, m):
    return ((n + m - 1) // m) * m


# --------------------------------------------------------------------------
# Pallas kernel: full VAE forward for one (TB, ...) batch tile
# --------------------------------------------------------------------------
def _vae_kernel(
    x_ref, eps_ref,
    w1, b1, w2, b2, w3, b3, w4, b4, w5, b5, w6, b6,
    recon_ref, muls_ref,
):
    x = x_ref[...]                                               # (TB, 256) bf16

    # ---------------- encoder ----------------
    h = jnp.dot(x, w1[...], preferred_element_type=jnp.float32) + b1[...]
    h = jnp.maximum(h, 0.0).astype(jnp.bfloat16)                 # relu(fc1)  (TB, 256)

    z = jnp.dot(h, w2[...], preferred_element_type=jnp.float32) + b2[...]
    z = jnp.maximum(z, 0.0).astype(jnp.bfloat16)                 # relu(fc2)  (TB, 64)

    # fused fc31|fc32: one (64, 16) matmul; cols 0:8 = mu(pad), 8:16 = logsig(pad)
    muls = jnp.dot(z, w3[...], preferred_element_type=jnp.float32) + b3[...]
    mu = muls[:, 0:LATENT_PAD]                                   # (TB, 8) f32
    logsig = muls[:, LATENT_PAD:2 * LATENT_PAD]                  # (TB, 8) f32

    # ------------- reparameterize (f32) -------------
    std = jnp.exp(0.5 * logsig)
    zlat = (mu + eps_ref[...] * std).astype(jnp.bfloat16)        # (TB, 8)

    # ---------------- decoder ----------------
    h4 = jnp.dot(zlat, w4[...], preferred_element_type=jnp.float32) + b4[...]
    h4 = jnp.maximum(h4, 0.0).astype(jnp.bfloat16)               # relu(fc4)  (TB, 64)

    h5 = jnp.dot(h4, w5[...], preferred_element_type=jnp.float32) + b5[...]
    h5 = jnp.maximum(h5, 0.0).astype(jnp.bfloat16)               # relu(fc5)  (TB, 256)

    logits = jnp.dot(h5, w6[...], preferred_element_type=jnp.float32) + b6[...]
    recon_ref[...] = jax.nn.sigmoid(logits)                      # sigmoid(fc6) (TB, 256)
    muls_ref[...] = muls                                         # packed mu|logsig (TB, 16)


# --------------------------------------------------------------------------
# One-time parameter prep: pad / fuse / transpose-free bf16 cast
# --------------------------------------------------------------------------
def prepare_params(params):
    """params: dict name -> (W(in,out) f32, b(out,) f32)  ->  flat kernel operands."""
    def pad_to(a, shape):
        return jnp.pad(a, [(0, s - d) for d, s in zip(a.shape, shape)])

    w1, b1 = params["fc1"]     # (196, 256), (256,)
    w2, b2 = params["fc2"]     # (256, 64),  (64,)
    w31, b31 = params["fc31"]  # (64, 5),    (5,)
    w32, b32 = params["fc32"]  # (64, 5),    (5,)
    w4, b4 = params["fc4"]     # (5, 64),    (64,)
    w5, b5 = params["fc5"]     # (64, 256),  (256,)
    w6, b6 = params["fc6"]     # (256, 196), (196,)

    w1p = pad_to(w1, (IN_PAD, 256)).astype(jnp.bfloat16)                      # (256, 256)
    w3p = jnp.concatenate(
        [pad_to(w31, (64, LATENT_PAD)), pad_to(w32, (64, LATENT_PAD))], axis=1
    ).astype(jnp.bfloat16)                                                    # (64, 16)
    b3p = jnp.concatenate(
        [pad_to(b31, (LATENT_PAD,)), pad_to(b32, (LATENT_PAD,))]
    ).reshape(1, 2 * LATENT_PAD).astype(jnp.float32)                          # (1, 16)
    w4p = pad_to(w4, (LATENT_PAD, 64)).astype(jnp.bfloat16)                   # (8, 64)
    w6p = pad_to(w6, (256, IN_PAD)).astype(jnp.bfloat16)                      # (256, 256)
    b6p = pad_to(b6, (IN_PAD,)).reshape(1, IN_PAD).astype(jnp.float32)        # (1, 256)

    return (
        w1p, b1.reshape(1, -1).astype(jnp.float32),
        w2.astype(jnp.bfloat16), b2.reshape(1, -1).astype(jnp.float32),
        w3p, b3p,
        w4p, b4.reshape(1, -1).astype(jnp.float32),
        w5.astype(jnp.bfloat16), b5.reshape(1, -1).astype(jnp.float32),
        w6p, b6p,
    )


# --------------------------------------------------------------------------
# Wrapper
# --------------------------------------------------------------------------
@jax.jit
def vae_forward(x, eps, prepped):
    """x: (B, 1, 14, 14) or (B, 196); eps: (B, 5). Returns (recon, mu, logsig)."""
    x2d = x.reshape(-1, IN_FEATS)                         # x.view(-1, 196)
    B = x2d.shape[0]

    TB = min(MAX_TB, _round_up(B, 8))                     # batch tile
    Bp = _round_up(B, TB)                                 # padded batch
    grid = (Bp // TB,)

    # zero-pad batch and feature/latent axes (zeros contribute nothing)
    xp = jnp.zeros((Bp, IN_PAD), jnp.bfloat16).at[:B, :IN_FEATS].set(
        x2d.astype(jnp.bfloat16))
    epsp = jnp.zeros((Bp, LATENT_PAD), jnp.float32).at[:B, :LATENT].set(
        eps.astype(jnp.float32))

    def wspec(shape):
        return pl.BlockSpec(shape, lambda i: (0, 0))      # VMEM-resident operand

    in_specs = [
        pl.BlockSpec((TB, IN_PAD), lambda i: (i, 0)),     # x tile
        pl.BlockSpec((TB, LATENT_PAD), lambda i: (i, 0)), # eps tile
        wspec((IN_PAD, 256)), wspec((1, 256)),            # fc1
        wspec((256, 64)), wspec((1, 64)),                 # fc2
        wspec((64, 2 * LATENT_PAD)), wspec((1, 2 * LATENT_PAD)),  # fused fc31|fc32
        wspec((LATENT_PAD, 64)), wspec((1, 64)),          # fc4
        wspec((64, 256)), wspec((1, 256)),                # fc5
        wspec((256, IN_PAD)), wspec((1, IN_PAD)),         # fc6
    ]
    out_specs = (
        pl.BlockSpec((TB, IN_PAD), lambda i: (i, 0)),         # recon (lane-dense 256)
        pl.BlockSpec((TB, 2 * LATENT_PAD), lambda i: (i, 0)), # packed mu|logsig
    )
    out_shape = (
        jax.ShapeDtypeStruct((Bp, IN_PAD), jnp.float32),
        jax.ShapeDtypeStruct((Bp, 2 * LATENT_PAD), jnp.float32),
    )

    recon_pad, muls = pl.pallas_call(
        _vae_kernel,
        grid=grid,
        in_specs=in_specs,
        out_specs=out_specs,
        out_shape=out_shape,
        compiler_params=pltpu.CompilerParams(
            dimension_semantics=("parallel",)),
    )(xp, epsp, *prepped)

    recon = recon_pad[:B, :IN_FEATS]
    mu = muls[:B, :LATENT]
    logsig = muls[:B, LATENT_PAD:LATENT_PAD + LATENT]
    return recon, mu, logsig


# --------------------------------------------------------------------------
# Deterministic parameter init (PyTorch nn.Linear-style uniform, (in,out) layout)
# --------------------------------------------------------------------------
def init_params(key):
    layer_dims = {
        "fc1": (196, 256),
        "fc2": (256, 64),
        "fc31": (64, 5),
        "fc32": (64, 5),
        "fc4": (5, 64),
        "fc5": (64, 256),
        "fc6": (256, 196),
    }
    params = {}
    for name, (fan_in, fan_out) in layer_dims.items():
        key, kw, kb = jax.random.split(key, 3)
        bound = 1.0 / (fan_in ** 0.5)
        w = jax.random.uniform(kw, (fan_in, fan_out), jnp.float32, -bound, bound)
        b = jax.random.uniform(kb, (fan_out,), jnp.float32, -bound, bound)
        params[name] = (w, b)
    return params


# --------------------------------------------------------------------------
# Pure-JAX reference (compute_dtype=bf16 mirrors the kernel's MXU precision)
# --------------------------------------------------------------------------
def vae_reference(x, eps, params, compute_dtype=jnp.float32):
    x2d = x.reshape(-1, IN_FEATS)

    def lin(v, p):
        w, b = p
        return jnp.dot(v.astype(compute_dtype), w.astype(compute_dtype),
                       preferred_element_type=jnp.float32) + b

    h = jax.nn.relu(lin(x2d, params["fc1"]))
    z = jax.nn.relu(lin(h, params["fc2"]))
    mu = lin(z, params["fc31"])
    logsig = lin(z, params["fc32"])
    zlat = mu + eps * jnp.exp(0.5 * logsig)
    h4 = jax.nn.relu(lin(zlat, params["fc4"]))
    h5 = jax.nn.relu(lin(h4, params["fc5"]))
    recon = jax.nn.sigmoid(lin(h5, params["fc6"]))
    return recon, mu, logsig


if __name__ == "__main__":
    key = jax.random.PRNGKey(0)
    key, kx, keps, kp = jax.random.split(key, 4)

    B = 8
    x = jax.random.uniform(kx, (B, 1, 14, 14), jnp.float32)    # NCHW, 14*14 = 196
    eps = jax.random.normal(keps, (B, LATENT), jnp.float32)    # torch.randn_like(std)
    params = init_params(kp)
    prepped = prepare_params(params)                           # one-time pad/fuse/bf16

    recon, mu, logsig = vae_forward(x, eps, prepped)
    jax.block_until_ready((recon, mu, logsig))

    assert recon.shape == (B, IN_FEATS) and mu.shape == (B, LATENT) and logsig.shape == (B, LATENT)

    # tight check vs a bf16-matmul reference (same MXU precision as the kernel)
    r_bf, mu_bf, ls_bf = vae_reference(x, eps, params, compute_dtype=jnp.bfloat16)
    assert jnp.allclose(recon, r_bf, atol=5e-3, rtol=5e-3)
    assert jnp.allclose(mu, mu_bf, atol=5e-3, rtol=5e-3)
    assert jnp.allclose(logsig, ls_bf, atol=5e-3, rtol=5e-3)

    # looser check vs the full-f32 reference (bf16 MXU rounding)
    r_f32, mu_f32, ls_f32 = vae_reference(x, eps, params)
    assert jnp.allclose(recon, r_f32, atol=5e-2, rtol=5e-2)
    assert jnp.allclose(mu, mu_f32, atol=5e-2, rtol=5e-2)
    assert jnp.allclose(logsig, ls_f32, atol=5e-2, rtol=5e-2)

    print("KERNEL_OK")
</pallas_src>

<mosaic_0001>
module attributes {stable_mosaic.version = 11 : i64} {
  func.func @_vae_kernel(%arg0: i32, %arg1: memref<8x256xbf16, #tpu.memory_space<vmem>>, %arg2: memref<8x8xf32, #tpu.memory_space<vmem>>, %arg3: memref<256x256xbf16, #tpu.memory_space<vmem>>, %arg4: memref<1x256xf32, #tpu.memory_space<vmem>>, %arg5: memref<256x64xbf16, #tpu.memory_space<vmem>>, %arg6: memref<1x64xf32, #tpu.memory_space<vmem>>, %arg7: memref<64x16xbf16, #tpu.memory_space<vmem>>, %arg8: memref<1x16xf32, #tpu.memory_space<vmem>>, %arg9: memref<8x64xbf16, #tpu.memory_space<vmem>>, %arg10: memref<1x64xf32, #tpu.memory_space<vmem>>, %arg11: memref<64x256xbf16, #tpu.memory_space<vmem>>, %arg12: memref<1x256xf32, #tpu.memory_space<vmem>>, %arg13: memref<256x256xbf16, #tpu.memory_space<vmem>>, %arg14: memref<1x256xf32, #tpu.memory_space<vmem>>, %arg15: memref<8x256xf32, #tpu.memory_space<vmem>>, %arg16: memref<8x16xf32, #tpu.memory_space<vmem>>) attributes {dimension_semantics = [#tpu.dimension_semantics<parallel>], iteration_bounds = array<i64: 1>, scalar_prefetch = 0 : i64, scratch_operands = 0 : i64, tpu.core_type = #tpu.core_type<tc>, window_params = [{transform_indices = @transform_0, window_bounds = array<i64: 8, 256>}, {transform_indices = @transform_1, window_bounds = array<i64: 8, 8>}, {pipeline_mode = #tpu.pipeline_mode<synchronous>, transform_indices = @transform_2, window_bounds = array<i64: 256, 256>}, {pipeline_mode = #tpu.pipeline_mode<synchronous>, transform_indices = @transform_3, window_bounds = array<i64: 1, 256>}, {pipeline_mode = #tpu.pipeline_mode<synchronous>, transform_indices = @transform_4, window_bounds = array<i64: 256, 64>}, {pipeline_mode = #tpu.pipeline_mode<synchronous>, transform_indices = @transform_5, window_bounds = array<i64: 1, 64>}, {pipeline_mode = #tpu.pipeline_mode<synchronous>, transform_indices = @transform_6, window_bounds = array<i64: 64, 16>}, {pipeline_mode = #tpu.pipeline_mode<synchronous>, transform_indices = @transform_7, window_bounds = array<i64: 1, 16>}, {pipeline_mode = #tpu.pipeline_mode<synchronous>, transform_indices = @transform_8, window_bounds = array<i64: 8, 64>}, {pipeline_mode = #tpu.pipeline_mode<synchronous>, transform_indices = @transform_9, window_bounds = array<i64: 1, 64>}, {pipeline_mode = #tpu.pipeline_mode<synchronous>, transform_indices = @transform_10, window_bounds = array<i64: 64, 256>}, {pipeline_mode = #tpu.pipeline_mode<synchronous>, transform_indices = @transform_11, window_bounds = array<i64: 1, 256>}, {pipeline_mode = #tpu.pipeline_mode<synchronous>, transform_indices = @transform_12, window_bounds = array<i64: 256, 256>}, {pipeline_mode = #tpu.pipeline_mode<synchronous>, transform_indices = @transform_13, window_bounds = array<i64: 1, 256>}, {transform_indices = @transform_14, window_bounds = array<i64: 8, 256>}, {transform_indices = @transform_15, window_bounds = array<i64: 8, 16>}]} {
    %c0 = arith.constant 0 : index
    %c0_0 = arith.constant 0 : index
    %0 = vector.load %arg1[%c0, %c0_0] : memref<8x256xbf16, #tpu.memory_space<vmem>>, vector<8x256xbf16>
    %c0_1 = arith.constant 0 : index
    %c0_2 = arith.constant 0 : index
    %1 = vector.load %arg3[%c0_1, %c0_2] : memref<256x256xbf16, #tpu.memory_space<vmem>>, vector<256x256xbf16>
    %cst = arith.constant dense<0.000000e+00> : vector<8x256xf32>
    %2 = tpu.matmul %0, %1, %cst {dimension_numbers = #tpu.dot_dimension_numbers<[1], [0], [0], [1], [0, 0, 1, 1], [], []>} : vector<8x256xbf16>, vector<256x256xbf16>, vector<8x256xf32> -> vector<8x256xf32>
    %c0_3 = arith.constant 0 : index
    %c0_4 = arith.constant 0 : index
    %3 = vector.load %arg4[%c0_3, %c0_4] : memref<1x256xf32, #tpu.memory_space<vmem>>, vector<1x256xf32>
    %4 = vector.broadcast %3 : vector<1x256xf32> to vector<8x256xf32>
    %5 = arith.addf %2, %4 : vector<8x256xf32>
    %cst_5 = arith.constant 0.000000e+00 : f32
    %6 = vector.broadcast %cst_5 : f32 to vector<8x256xf32>
    %7 = arith.maximumf %5, %6 : vector<8x256xf32>
    %8 = arith.truncf %7 : vector<8x256xf32> to vector<8x256xbf16>
    %c0_6 = arith.constant 0 : index
    %c0_7 = arith.constant 0 : index
    %9 = vector.load %arg5[%c0_6, %c0_7] : memref<256x64xbf16, #tpu.memory_space<vmem>>, vector<256x64xbf16>
    %cst_8 = arith.constant dense<0.000000e+00> : vector<8x64xf32>
    %10 = tpu.matmul %8, %9, %cst_8 {dimension_numbers = #tpu.dot_dimension_numbers<[1], [0], [0], [1], [0, 0, 1, 1], [], []>} : vector<8x256xbf16>, vector<256x64xbf16>, vector<8x64xf32> -> vector<8x64xf32>
    %c0_9 = arith.constant 0 : index
    %c0_10 = arith.constant 0 : index
    %11 = vector.load %arg6[%c0_9, %c0_10] : memref<1x64xf32, #tpu.memory_space<vmem>>, vector<1x64xf32>
    %12 = vector.broadcast %11 : vector<1x64xf32> to vector<8x64xf32>
    %13 = arith.addf %10, %12 : vector<8x64xf32>
    %cst_11 = arith.constant 0.000000e+00 : f32
    %14 = vector.broadcast %cst_11 : f32 to vector<8x64xf32>
    %15 = arith.maximumf %13, %14 : vector<8x64xf32>
    %16 = arith.truncf %15 : vector<8x64xf32> to vector<8x64xbf16>
    %c0_12 = arith.constant 0 : index
    %c0_13 = arith.constant 0 : index
    %17 = vector.load %arg7[%c0_12, %c0_13] : memref<64x16xbf16, #tpu.memory_space<vmem>>, vector<64x16xbf16>
    %cst_14 = arith.constant dense<0.000000e+00> : vector<8x16xf32>
    %18 = tpu.matmul %16, %17, %cst_14 {dimension_numbers = #tpu.dot_dimension_numbers<[1], [0], [0], [1], [0, 0, 1, 1], [], []>} : vector<8x64xbf16>, vector<64x16xbf16>, vector<8x16xf32> -> vector<8x16xf32>
    %c0_15 = arith.constant 0 : index
    %c0_16 = arith.constant 0 : index
    %19 = vector.load %arg8[%c0_15, %c0_16] : memref<1x16xf32, #tpu.memory_space<vmem>>, vector<1x16xf32>
    %20 = vector.broadcast %19 : vector<1x16xf32> to vector<8x16xf32>
    %21 = arith.addf %18, %20 : vector<8x16xf32>
    %22 = vector.extract_strided_slice %21 {offsets = [0, 0], sizes = [8, 8], strides = [1, 1]} : vector<8x16xf32> to vector<8x8xf32>
    %23 = vector.extract_strided_slice %21 {offsets = [0, 8], sizes = [8, 8], strides = [1, 1]} : vector<8x16xf32> to vector<8x8xf32>
    %cst_17 = arith.constant 5.000000e-01 : f32
    %24 = vector.broadcast %cst_17 : f32 to vector<8x8xf32>
    %25 = arith.mulf %24, %23 : vector<8x8xf32>
    %26 = math.exp %25 : vector<8x8xf32>
    %c0_18 = arith.constant 0 : index
    %c0_19 = arith.constant 0 : index
    %27 = vector.load %arg2[%c0_18, %c0_19] : memref<8x8xf32, #tpu.memory_space<vmem>>, vector<8x8xf32>
    %28 = arith.mulf %27, %26 : vector<8x8xf32>
    %29 = arith.addf %22, %28 : vector<8x8xf32>
    %30 = arith.truncf %29 : vector<8x8xf32> to vector<8x8xbf16>
    %c0_20 = arith.constant 0 : index
    %c0_21 = arith.constant 0 : index
    %31 = vector.load %arg9[%c0_20, %c0_21] : memref<8x64xbf16, #tpu.memory_space<vmem>>, vector<8x64xbf16>
    %cst_22 = arith.constant dense<0.000000e+00> : vector<8x64xf32>
    %32 = tpu.matmul %30, %31, %cst_22 {dimension_numbers = #tpu.dot_dimension_numbers<[1], [0], [0], [1], [0, 0, 1, 1], [], []>} : vector<8x8xbf16>, vector<8x64xbf16>, vector<8x64xf32> -> vector<8x64xf32>
    %c0_23 = arith.constant 0 : index
    %c0_24 = arith.constant 0 : index
    %33 = vector.load %arg10[%c0_23, %c0_24] : memref<1x64xf32, #tpu.memory_space<vmem>>, vector<1x64xf32>
    %34 = vector.broadcast %33 : vector<1x64xf32> to vector<8x64xf32>
    %35 = arith.addf %32, %34 : vector<8x64xf32>
    %cst_25 = arith.constant 0.000000e+00 : f32
    %36 = vector.broadcast %cst_25 : f32 to vector<8x64xf32>
    %37 = arith.maximumf %35, %36 : vector<8x64xf32>
    %38 = arith.truncf %37 : vector<8x64xf32> to vector<8x64xbf16>
    %c0_26 = arith.constant 0 : index
    %c0_27 = arith.constant 0 : index
    %39 = vector.load %arg11[%c0_26, %c0_27] : memref<64x256xbf16, #tpu.memory_space<vmem>>, vector<64x256xbf16>
    %cst_28 = arith.constant dense<0.000000e+00> : vector<8x256xf32>
    %40 = tpu.matmul %38, %39, %cst_28 {dimension_numbers = #tpu.dot_dimension_numbers<[1], [0], [0], [1], [0, 0, 1, 1], [], []>} : vector<8x64xbf16>, vector<64x256xbf16>, vector<8x256xf32> -> vector<8x256xf32>
    %c0_29 = arith.constant 0 : index
    %c0_30 = arith.constant 0 : index
    %41 = vector.load %arg12[%c0_29, %c0_30] : memref<1x256xf32, #tpu.memory_space<vmem>>, vector<1x256xf32>
    %42 = vector.broadcast %41 : vector<1x256xf32> to vector<8x256xf32>
    %43 = arith.addf %40, %42 : vector<8x256xf32>
    %cst_31 = arith.constant 0.000000e+00 : f32
    %44 = vector.broadcast %cst_31 : f32 to vector<8x256xf32>
    %45 = arith.maximumf %43, %44 : vector<8x256xf32>
    %46 = arith.truncf %45 : vector<8x256xf32> to vector<8x256xbf16>
    %c0_32 = arith.constant 0 : index
    %c0_33 = arith.constant 0 : index
    %47 = vector.load %arg13[%c0_32, %c0_33] : memref<256x256xbf16, #tpu.memory_space<vmem>>, vector<256x256xbf16>
    %cst_34 = arith.constant dense<0.000000e+00> : vector<8x256xf32>
    %48 = tpu.matmul %46, %47, %cst_34 {dimension_numbers = #tpu.dot_dimension_numbers<[1], [0], [0], [1], [0, 0, 1, 1], [], []>} : vector<8x256xbf16>, vector<256x256xbf16>, vector<8x256xf32> -> vector<8x256xf32>
    %c0_35 = arith.constant 0 : index
    %c0_36 = arith.constant 0 : index
    %49 = vector.load %arg14[%c0_35, %c0_36] : memref<1x256xf32, #tpu.memory_space<vmem>>, vector<1x256xf32>
    %50 = vector.broadcast %49 : vector<1x256xf32> to vector<8x256xf32>
    %51 = arith.addf %48, %50 : vector<8x256xf32>
    %52 = arith.negf %51 : vector<8x256xf32>
    %53 = math.exp %52 : vector<8x256xf32>
    %cst_37 = arith.constant 1.000000e+00 : f32
    %54 = vector.broadcast %cst_37 : f32 to vector<8x256xf32>
    %55 = arith.addf %54, %53 : vector<8x256xf32>
    %56 = arith.divf %54, %55 : vector<8x256xf32>
    %c0_38 = arith.constant 0 : index
    %c0_39 = arith.constant 0 : index
    %57 = vector.load %arg15[%c0_38, %c0_39] : memref<8x256xf32, #tpu.memory_space<vmem>>, vector<8x256xf32>
    tpu.vector_store %arg15[%c0_38, %c0_39], %56 {strides = array<i32>} : memref<8x256xf32, #tpu.memory_space<vmem>>, vector<8x256xf32>,
    %c0_40 = arith.constant 0 : index
    %c0_41 = arith.constant 0 : index
    %58 = vector.load %arg16[%c0_40, %c0_41] : memref<8x16xf32, #tpu.memory_space<vmem>>, vector<8x16xf32>
    tpu.vector_store %arg16[%c0_40, %c0_41], %21 {strides = array<i32>} : memref<8x16xf32, #tpu.memory_space<vmem>>, vector<8x16xf32>,
    return
  }
  func.func @transform_0(%arg0: i32) -> (i32, i32) {
    %c0_i32 = arith.constant 0 : i32
    %c0_i32_0 = arith.constant 0 : i32
    return %arg0, %c0_i32 : i32, i32
  }
  func.func @transform_1(%arg0: i32) -> (i32, i32) {
    %c0_i32 = arith.constant 0 : i32
    %c0_i32_0 = arith.constant 0 : i32
    return %arg0, %c0_i32 : i32, i32
  }
  func.func @transform_2(%arg0: i32) -> (i32, i32) {
    %c0_i32 = arith.constant 0 : i32
    %c0_i32_0 = arith.constant 0 : i32
    %c0_i32_1 = arith.constant 0 : i32
    return %c0_i32, %c0_i32_0 : i32, i32
  }
  func.func @transform_3(%arg0: i32) -> (i32, i32) {
    %c0_i32 = arith.constant 0 : i32
    %c0_i32_0 = arith.constant 0 : i32
    %c0_i32_1 = arith.constant 0 : i32
    return %c0_i32, %c0_i32_0 : i32, i32
  }
  func.func @transform_4(%arg0: i32) -> (i32, i32) {
    %c0_i32 = arith.constant 0 : i32
    %c0_i32_0 = arith.constant 0 : i32
    %c0_i32_1 = arith.constant 0 : i32
    return %c0_i32, %c0_i32_0 : i32, i32
  }
  func.func @transform_5(%arg0: i32) -> (i32, i32) {
    %c0_i32 = arith.constant 0 : i32
    %c0_i32_0 = arith.constant 0 : i32
    %c0_i32_1 = arith.constant 0 : i32
    return %c0_i32, %c0_i32_0 : i32, i32
  }
  func.func @transform_6(%arg0: i32) -> (i32, i32) {
    %c0_i32 = arith.constant 0 : i32
    %c0_i32_0 = arith.constant 0 : i32
    %c0_i32_1 = arith.constant 0 : i32
    return %c0_i32, %c0_i32_0 : i32, i32
  }
  func.func @transform_7(%arg0: i32) -> (i32, i32) {
    %c0_i32 = arith.constant 0 : i32
    %c0_i32_0 = arith.constant 0 : i32
    %c0_i32_1 = arith.constant 0 : i32
    return %c0_i32, %c0_i32_0 : i32, i32
  }
  func.func @transform_8(%arg0: i32) -> (i32, i32) {
    %c0_i32 = arith.constant 0 : i32
    %c0_i32_0 = arith.constant 0 : i32
    %c0_i32_1 = arith.constant 0 : i32
    return %c0_i32, %c0_i32_0 : i32, i32
  }
  func.func @transform_9(%arg0: i32) -> (i32, i32) {
    %c0_i32 = arith.constant 0 : i32
    %c0_i32_0 = arith.constant 0 : i32
    %c0_i32_1 = arith.constant 0 : i32
    return %c0_i32, %c0_i32_0 : i32, i32
  }
  func.func @transform_10(%arg0: i32) -> (i32, i32) {
    %c0_i32 = arith.constant 0 : i32
    %c0_i32_0 = arith.constant 0 : i32
    %c0_i32_1 = arith.constant 0 : i32
    return %c0_i32, %c0_i32_0 : i32, i32
  }
  func.func @transform_11(%arg0: i32) -> (i32, i32) {
    %c0_i32 = arith.constant 0 : i32
    %c0_i32_0 = arith.constant 0 : i32
    %c0_i32_1 = arith.constant 0 : i32
    return %c0_i32, %c0_i32_0 : i32, i32
  }
  func.func @transform_12(%arg0: i32) -> (i32, i32) {
    %c0_i32 = arith.constant 0 : i32
    %c0_i32_0 = arith.constant 0 : i32
    %c0_i32_1 = arith.constant 0 : i32
    return %c0_i32, %c0_i32_0 : i32, i32
  }
  func.func @transform_13(%arg0: i32) -> (i32, i32) {
    %c0_i32 = arith.constant 0 : i32
    %c0_i32_0 = arith.constant 0 : i32
    %c0_i32_1 = arith.constant 0 : i32
    return %c0_i32, %c0_i32_0 : i32, i32
  }
  func.func @transform_14(%arg0: i32) -> (i32, i32) {
    %c0_i32 = arith.constant 0 : i32
    %c0_i32_0 = arith.constant 0 : i32
    return %arg0, %c0_i32 : i32, i32
  }
  func.func @transform_15(%arg0: i32) -> (i32, i32) {
    %c0_i32 = arith.constant 0 : i32
    %c0_i32_0 = arith.constant 0 : i32
    return %arg0, %c0_i32 : i32, i32
  }
}

</mosaic_0001>

<llo_original>
// kernel: vae_forward.1
$region0: #{vae_forward.1}
  #allocation0 [shape = 'u32[]', space=smem, size = 0x4, offset = 0x4, fixed_abs, tag = 'smem constant byte address 0x4 - core index']
  #allocation1 [shape = 'u32[144,128]{1,0:T(1,128)}', space=vmem, size = 0x12000, scoped, tag = 'internal scratch']
  %s0 = inlined_call_operand.vmem [shape: bf16[8,256], index: 0, kind: input, shape index: {}]
  %s1 = inlined_call_operand.vmem [shape: f32[8,8], index: 1, kind: input, shape index: {}]
  %s2 = inlined_call_operand.vmem [shape: bf16[256,256], index: 2, kind: input, shape index: {}]
  %s3 = inlined_call_operand.vmem [shape: f32[1,256], index: 3, kind: input, shape index: {}]
  %s4 = inlined_call_operand.vmem [shape: bf16[256,64], index: 4, kind: input, shape index: {}]
  %s5 = inlined_call_operand.vmem [shape: f32[1,64], index: 5, kind: input, shape index: {}]
  %s6 = inlined_call_operand.vmem [shape: bf16[64,16], index: 6, kind: input, shape index: {}]
  %s7 = inlined_call_operand.vmem [shape: f32[1,16], index: 7, kind: input, shape index: {}]
  %s8 = inlined_call_operand.vmem [shape: bf16[8,64], index: 8, kind: input, shape index: {}]
  %s9 = inlined_call_operand.vmem [shape: f32[1,64], index: 9, kind: input, shape index: {}]
  %s10 = inlined_call_operand.hbm [shape: bf16[64,256], index: 10, kind: input, shape index: {}]
  %s11 = inlined_call_operand.vmem [shape: f32[1,256], index: 11, kind: input, shape index: {}]
  %s12 = inlined_call_operand.vmem [shape: bf16[256,256], index: 12, kind: input, shape index: {}]
  %s13 = inlined_call_operand.vmem [shape: f32[1,256], index: 13, kind: input, shape index: {}]
  %s14 = inlined_call_operand.hbm [shape: f32[8,256], index: 14, kind: output, shape index: {0}]
  %s15 = inlined_call_operand.vmem [shape: f32[8,16], index: 15, kind: output, shape index: {1}]
  %16 = xla_tuple %s14, %s15
  %s17 = sld [smem:[#allocation0]]
  $region78: #{vae_forward.1} parent=0
    _
  %s19 = ssub.s32 1, %s17
  %s20 = scalar_select 0, %s19, %s17
  $region1: #{vae_forward.1} parent=0
    #allocation2 [shape = 'u8[32768]{0}', space=vmem, size = 0x8000, scoped, tag = 'input window, operand 10, single buffered']
    #allocation3 [shape = 's32[1]{0}', space=sflag, size = 0x4, scoped, tag = 'scoped memory for vae_forward.1']
    #allocation4 [shape = 's32[1]{0}', space=sflag, size = 0x4, scoped, tag = 'scoped memory for vae_forward.1']
    #allocation5 [shape = 'u8[8192]{0}', space=vmem, size = 0x2000, scoped, tag = 'output window, operand 0, single buffered']
    %21 = vsyncpa [#allocation3], 0
    %22 = vsyncpa [#allocation4], 0
    // Predicated region
    $region2: #{vae_forward.1} parent=1 // pred_check
      _
    $region3: #{vae_forward.1} parent=1 // pred_check_branch
      %24 = sbr.rel (0) target = $region5
    $region4: #{vae_forward.1} parent=1 // pred_region
      _
    $region5: #{vae_forward.1} parent=1 // pred_fallthru
      _
    // Predicated region
    $region6: #{vae_forward.1} parent=1 // pred_check
      _
    $region7: #{vae_forward.1} parent=1 // pred_check_branch
      %26 = sbr.rel (0) target = $region9
    $region8: #{vae_forward.1} parent=1 // pred_region
      _
    $region9: #{vae_forward.1} parent=1 // pred_fallthru
      _
    // Predicated region
    $region10: #{vae_forward.1} parent=1 // pred_check
      _
    $region11: #{vae_forward.1} parent=1 // pred_check_branch
      %28 = sbr.rel (0) target = $region13
    $region12: #{vae_forward.1} parent=1 // pred_region
      _
    $region13: #{vae_forward.1} parent=1 // pred_fallthru
      _
    // Predicated region
    $region14: #{vae_forward.1} parent=1 // pred_check
      _
    $region15: #{vae_forward.1} parent=1 // pred_check_branch
      %30 = sbr.rel (0) target = $region17
    $region16: #{vae_forward.1} parent=1 // pred_region
      _
    $region17: #{vae_forward.1} parent=1 // pred_fallthru
      _
    // Predicated region
    $region18: #{vae_forward.1} parent=1 // pred_check
      _
    $region19: #{vae_forward.1} parent=1 // pred_check_branch
      %32 = sbr.rel (0) target = $region21
    $region20: #{vae_forward.1} parent=1 // pred_region
      _
    $region21: #{vae_forward.1} parent=1 // pred_fallthru
      _
    // Predicated region
    $region22: #{vae_forward.1} parent=1 // pred_check
      _
    $region23: #{vae_forward.1} parent=1 // pred_check_branch
      %34 = sbr.rel (0) target = $region25
    $region24: #{vae_forward.1} parent=1 // pred_region
      _
    $region25: #{vae_forward.1} parent=1 // pred_fallthru
      _
    // Predicated region
    $region26: #{vae_forward.1} parent=1 // pred_check
      _
    $region27: #{vae_forward.1} parent=1 // pred_check_branch
      %36 = sbr.rel (0) target = $region29
    $region28: #{vae_forward.1} parent=1 // pred_region
      _
    $region29: #{vae_forward.1} parent=1 // pred_fallthru
      _
    // Predicated region
    $region30: #{vae_forward.1} parent=1 // pred_check
      _
    $region31: #{vae_forward.1} parent=1 // pred_check_branch
      %38 = sbr.rel (0) target = $region33
    $region32: #{vae_forward.1} parent=1 // pred_region
      _
    $region33: #{vae_forward.1} parent=1 // pred_fallthru
      _
    // Predicated region
    $region34: #{vae_forward.1} parent=1 // pred_check
      _
    $region35: #{vae_forward.1} parent=1 // pred_check_branch
      %40 = sbr.rel (0) target = $region37
    $region36: #{vae_forward.1} parent=1 // pred_region
      _
    $region37: #{vae_forward.1} parent=1 // pred_fallthru
      _
    // Predicated region
    $region38: #{vae_forward.1} parent=1 // pred_check
      _
    $region39: #{vae_forward.1} parent=1 // pred_check_branch
      %42 = sbr.rel (0) target = $region41
    $region40: #{vae_forward.1} parent=1 // pred_region
      _
    $region41: #{vae_forward.1} parent=1 // pred_fallthru
      _
    // Predicated region
    $region42: #{vae_forward.1} parent=1 // pred_check
      _
    $region43: #{vae_forward.1} parent=1 // pred_check_branch
      %44 = sbr.rel (0) target = $region45
    $region44: #{vae_forward.1} parent=1 // pred_region
      %s46 = ssub.s32 1024, 1024
      %47 = vsyncadd [#allocation3], %s46
      %s48 = sshll.u32 [#allocation2], 4
      %s49 = int_to_ptr.vmem [resolvable:$true] %s48
      %54 = dma.hbm_to_vmem [thread:$0]  %s10, 1024, %s49, [#allocation3], 128, 128, 8
    $region45: #{vae_forward.1} parent=1 // pred_fallthru
      _
    // Predicated region
    $region46: #{vae_forward.1} parent=1 // pred_check
      _
    $region47: #{vae_forward.1} parent=1 // pred_check_branch
      %56 = sbr.rel (0) target = $region49
    $region48: #{vae_forward.1} parent=1 // pred_region
      _
    $region49: #{vae_forward.1} parent=1 // pred_fallthru
      _
    // Predicated region
    $region50: #{vae_forward.1} parent=1 // pred_check
      _
    $region51: #{vae_forward.1} parent=1 // pred_check_branch
      %58 = sbr.rel (0) target = $region53
    $region52: #{vae_forward.1} parent=1 // pred_region
      _
    $region53: #{vae_forward.1} parent=1 // pred_fallthru
      _
    // Predicated region
    $region54: #{vae_forward.1} parent=1 // pred_check
      _
    $region55: #{vae_forward.1} parent=1 // pred_check_branch
      %60 = sbr.rel (0) target = $region57
    $region56: #{vae_forward.1} parent=1 // pred_region
      _
    $region57: #{vae_forward.1} parent=1 // pred_fallthru
      _
    // Predicated region
    $region58: #{vae_forward.1} parent=1 // pred_check
      _
    $region59: #{vae_forward.1} parent=1 // pred_check_branch
      %62 = sbr.rel (0) target = $region61
    $region60: #{vae_forward.1} parent=1 // pred_region
      %63 = dma.done [#allocation3], 1024
    $region61: #{vae_forward.1} parent=1 // pred_fallthru
      _
    %v65 = vld [vmem:[%s0] sm:$0xff]
    %v66 = vld [vmem:[%s2] sm:$0xff]
    %v67 = vld [vmem:[%s2 + $0x8] sm:$0xff]
    %v68 = vld [vmem:[%s2 + $0x10] sm:$0xff]
    %v69 = vld [vmem:[%s2 + $0x18] sm:$0xff]
    %v70 = vld [vmem:[%s2 + $0x20] sm:$0xff]
    %v71 = vld [vmem:[%s2 + $0x28] sm:$0xff]
    %v72 = vld [vmem:[%s2 + $0x30] sm:$0xff]
    %v73 = vld [vmem:[%s2 + $0x38] sm:$0xff]
    %v74 = vld [vmem:[%s2 + $0x40] sm:$0xff]
    %v75 = vld [vmem:[%s2 + $0x48] sm:$0xff]
    %v76 = vld [vmem:[%s2 + $0x50] sm:$0xff]
    %v77 = vld [vmem:[%s2 + $0x58] sm:$0xff]
    %v78 = vld [vmem:[%s2 + $0x60] sm:$0xff]
    %v79 = vld [vmem:[%s2 + $0x68] sm:$0xff]
    %v80 = vld [vmem:[%s2 + $0x70] sm:$0xff]
    %v81 = vld [vmem:[%s2 + $0x78] sm:$0xff]
    %v82 = vld [vmem:[%s2 + $0x80] sm:$0xff]
    %v83 = vld [vmem:[%s2 + $0x88] sm:$0xff]
    %v84 = vld [vmem:[%s2 + $0x90] sm:$0xff]
    %v85 = vld [vmem:[%s2 + $0x98] sm:$0xff]
    %v86 = vld [vmem:[%s2 + $0xa0] sm:$0xff]
    %v87 = vld [vmem:[%s2 + $0xa8] sm:$0xff]
    %v88 = vld [vmem:[%s2 + $0xb0] sm:$0xff]
    %v89 = vld [vmem:[%s2 + $0xb8] sm:$0xff]
    %v90 = vld [vmem:[%s2 + $0xc0] sm:$0xff]
    %v91 = vld [vmem:[%s2 + $0xc8] sm:$0xff]
    %v92 = vld [vmem:[%s2 + $0xd0] sm:$0xff]
    %v93 = vld [vmem:[%s2 + $0xd8] sm:$0xff]
    %v94 = vld [vmem:[%s2 + $0xe0] sm:$0xff]
    %v95 = vld [vmem:[%s2 + $0xe8] sm:$0xff]
    %v96 = vld [vmem:[%s2 + $0xf0] sm:$0xff]
    %v97 = vld [vmem:[%s2 + $0xf8] sm:$0xff]
    %v98 = vld [vmem:[%s3] sm:$0x3]
    %v100 = vlaneseq
    %v101 = vshrl.u32 %v100, 7
    %v102 = vsub.s32 0, %v101
    %v103 = vrot.slane %v98, %v102
    %v104 = vlaneseq
    %v105 = vshrl.u32 %v104, 7
    %v106 = vsub.s32 1, %v105
    %v107 = vrot.slane %v98, %v106
    %v111 = vunpack.c.l.b16 %v65
    %v112 = vunpack.c.h.b16 %v65
    %v113 = vpack.c.b16 %v111, %v111
    %v114 = vpack.c.b16 %v112, %v112
    %v149 = vunpack.c.l.b16 %v66
    %v150 = vunpack.c.h.b16 %v66
    %v151 = vunpack.c.l.b16 %v67
    %v152 = vunpack.c.h.b16 %v67
    %v153 = vunpack.c.l.b16 %v68
    %v154 = vunpack.c.h.b16 %v68
    %v155 = vunpack.c.l.b16 %v69
    %v156 = vunpack.c.h.b16 %v69
    %v157 = vunpack.c.l.b16 %v70
    %v158 = vunpack.c.h.b16 %v70
    %v159 = vunpack.c.l.b16 %v71
    %v160 = vunpack.c.h.b16 %v71
    %v161 = vunpack.c.l.b16 %v72
    %v162 = vunpack.c.h.b16 %v72
    %v163 = vunpack.c.l.b16 %v73
    %v164 = vunpack.c.h.b16 %v73
    %v165 = vunpack.c.l.b16 %v74
    %v166 = vunpack.c.h.b16 %v74
    %v167 = vunpack.c.l.b16 %v75
    %v168 = vunpack.c.h.b16 %v75
    %v169 = vunpack.c.l.b16 %v76
    %v170 = vunpack.c.h.b16 %v76
    %v171 = vunpack.c.l.b16 %v77
    %v172 = vunpack.c.h.b16 %v77
    %v173 = vunpack.c.l.b16 %v78
    %v174 = vunpack.c.h.b16 %v78
    %v175 = vunpack.c.l.b16 %v79
    %v176 = vunpack.c.h.b16 %v79
    %v177 = vunpack.c.l.b16 %v80
    %v178 = vunpack.c.h.b16 %v80
    %v179 = vunpack.c.l.b16 %v81
    %v180 = vunpack.c.h.b16 %v81
    %v181 = vunpack.c.l.b16 %v82
    %v182 = vunpack.c.h.b16 %v82
    %v183 = vunpack.c.l.b16 %v83
    %v184 = vunpack.c.h.b16 %v83
    %v185 = vunpack.c.l.b16 %v84
    %v186 = vunpack.c.h.b16 %v84
    %v187 = vunpack.c.l.b16 %v85
    %v188 = vunpack.c.h.b16 %v85
    %v189 = vunpack.c.l.b16 %v86
    %v190 = vunpack.c.h.b16 %v86
    %v191 = vunpack.c.l.b16 %v87
    %v192 = vunpack.c.h.b16 %v87
    %v193 = vunpack.c.l.b16 %v88
    %v194 = vunpack.c.h.b16 %v88
    %v195 = vunpack.c.l.b16 %v89
    %v196 = vunpack.c.h.b16 %v89
    %v197 = vunpack.c.l.b16 %v90
    %v198 = vunpack.c.h.b16 %v90
    %v199 = vunpack.c.l.b16 %v91
    %v200 = vunpack.c.h.b16 %v91
    %v201 = vunpack.c.l.b16 %v92
    %v202 = vunpack.c.h.b16 %v92
    %v203 = vunpack.c.l.b16 %v93
    %v204 = vunpack.c.h.b16 %v93
    %v205 = vunpack.c.l.b16 %v94
    %v206 = vunpack.c.h.b16 %v94
    %v207 = vunpack.c.l.b16 %v95
    %v208 = vunpack.c.h.b16 %v95
    %v209 = vunpack.c.l.b16 %v96
    %v210 = vunpack.c.h.b16 %v96
    %v211 = vunpack.c.l.b16 %v97
    %v212 = vunpack.c.h.b16 %v97
    %v213 = vpack.c.b16 %v151, %v149
    %v214 = vpack.c.b16 %v152, %v150
    %v215 = vpack.c.b16 %v155, %v153
    %v216 = vpack.c.b16 %v156, %v154
    %v217 = vpack.c.b16 %v159, %v157
    %v218 = vpack.c.b16 %v160, %v158
    %v219 = vpack.c.b16 %v163, %v161
    %v220 = vpack.c.b16 %v164, %v162
    %v221 = vpack.c.b16 %v167, %v165
    %v222 = vpack.c.b16 %v168, %v166
    %v223 = vpack.c.b16 %v171, %v169
    %v224 = vpack.c.b16 %v172, %v170
    %v225 = vpack.c.b16 %v175, %v173
    %v226 = vpack.c.b16 %v176, %v174
    %v227 = vpack.c.b16 %v179, %v177
    %v228 = vpack.c.b16 %v180, %v178
    %v229 = vpack.c.b16 %v183, %v181
    %v230 = vpack.c.b16 %v184, %v182
    %v231 = vpack.c.b16 %v187, %v185
    %v232 = vpack.c.b16 %v188, %v186
    %v233 = vpack.c.b16 %v191, %v189
    %v234 = vpack.c.b16 %v192, %v190
    %v235 = vpack.c.b16 %v195, %v193
    %v236 = vpack.c.b16 %v196, %v194
    %v237 = vpack.c.b16 %v199, %v197
    %v238 = vpack.c.b16 %v200, %v198
    %v239 = vpack.c.b16 %v203, %v201
    %v240 = vpack.c.b16 %v204, %v202
    %v241 = vpack.c.b16 %v207, %v205
    %v242 = vpack.c.b16 %v208, %v206
    %v243 = vpack.c.b16 %v211, %v209
    %v244 = vpack.c.b16 %v212, %v210
    %277 = vmatprep.subr.bf16.mxu0 %v228
    %278 = vmatpush1.bf16.msra.mxu0 %v227
    %279 = vmatprep.subr.bf16.mxu0 %v226
    %280 = vmatpush1.bf16.msra.mxu0 %v225
    %281 = vmatprep.subr.bf16.mxu0 %v224
    %282 = vmatpush1.bf16.msra.mxu0 %v223
    %283 = vmatprep.subr.bf16.mxu0 %v222
    %284 = vmatpush1.bf16.msra.mxu0 %v221
    %285 = vmatprep.subr.bf16.mxu0 %v220
    %286 = vmatpush1.bf16.msra.mxu0 %v219
    %287 = vmatprep.subr.bf16.mxu0 %v218
    %288 = vmatpush1.bf16.msra.mxu0 %v217
    %289 = vmatprep.subr.bf16.mxu0 %v216
    %290 = vmatpush1.bf16.msra.mxu0 %v215
    %291 = vmatprep.subr.bf16.mxu0 %v214
    %292 = vmatpush1.bf16.msra.mxu0 %v213
    %293 = vmatprep.subr.bf16.mxu0 %v244
    %294 = vmatpush2.bf16.msra.mxu0 %v243
    %295 = vmatprep.subr.bf16.mxu0 %v242
    %296 = vmatpush2.bf16.msra.mxu0 %v241
    %297 = vmatprep.subr.bf16.mxu0 %v240
    %298 = vmatpush2.bf16.msra.mxu0 %v239
    %299 = vmatprep.subr.bf16.mxu0 %v238
    %300 = vmatpush2.bf16.msra.mxu0 %v237
    %301 = vmatprep.subr.bf16.mxu0 %v236
    %302 = vmatpush2.bf16.msra.mxu0 %v235
    %303 = vmatprep.subr.bf16.mxu0 %v234
    %304 = vmatpush2.bf16.msra.mxu0 %v233
    %305 = vmatprep.subr.bf16.mxu0 %v232
    %306 = vmatpush2.bf16.msra.mxu0 %v231
    %307 = vmatprep.subr.bf16.mxu0 %v230
    %308 = vmatpush2.bf16.msra.mxu0 %v229
    %309 = vmatprep.mubr.bf16.mxu0 %v114
    %310 = vmatmul.mubr.bf16.gmra.mxu0 %v113
    %v311 = vpop.f32.mrf.mxu0
    %v312 = vadd.f32 %v103, %v311
    %v313 = vpop.f32.mrf.mxu0
    %v314 = vadd.f32 %v107, %v313
    %v315 = vpop.f32.mrf.mxu0
    %v316 = vpop.f32.mrf.mxu0
    %317 = vdwg.mxu0
    %v318 = vmax.f32 %v312, 0.0
    %v319 = vmax.f32 %v314, 0.0
    %v320 = vpack.c.bf16 %v318, %v318
    %v321 = vpack.c.bf16 %v319, %v319
    %v322 = vld [vmem:[%s4] sm:$0xf]
    %v323 = vld [vmem:[%s4 + $0x4] sm:$0xf]
    %v324 = vld [vmem:[%s4 + $0x8] sm:$0xf]
    %v325 = vld [vmem:[%s4 + $0xc] sm:$0xf]
    %v326 = vld [vmem:[%s4 + $0x10] sm:$0xf]
    %v327 = vld [vmem:[%s4 + $0x14] sm:$0xf]
    %v328 = vld [vmem:[%s4 + $0x18] sm:$0xf]
    %v329 = vld [vmem:[%s4 + $0x1c] sm:$0xf]
    %v330 = vld [vmem:[%s4 + $0x20] sm:$0xf]
    %v331 = vld [vmem:[%s4 + $0x24] sm:$0xf]
    %v332 = vld [vmem:[%s4 + $0x28] sm:$0xf]
    %v333 = vld [vmem:[%s4 + $0x2c] sm:$0xf]
    %v334 = vld [vmem:[%s4 + $0x30] sm:$0xf]
    %v335 = vld [vmem:[%s4 + $0x34] sm:$0xf]
    %v336 = vld [vmem:[%s4 + $0x38] sm:$0xf]
    %v337 = vld [vmem:[%s4 + $0x3c] sm:$0xf]
    %v338 = vld [vmem:[%s4 + $0x40] sm:$0xf]
    %v339 = vld [vmem:[%s4 + $0x44] sm:$0xf]
    %v340 = vld [vmem:[%s4 + $0x48] sm:$0xf]
    %v341 = vld [vmem:[%s4 + $0x4c] sm:$0xf]
    %v342 = vld [vmem:[%s4 + $0x50] sm:$0xf]
    %v343 = vld [vmem:[%s4 + $0x54] sm:$0xf]
    %v344 = vld [vmem:[%s4 + $0x58] sm:$0xf]
    %v345 = vld [vmem:[%s4 + $0x5c] sm:$0xf]
    %v346 = vld [vmem:[%s4 + $0x60] sm:$0xf]
    %v347 = vld [vmem:[%s4 + $0x64] sm:$0xf]
    %v348 = vld [vmem:[%s4 + $0x68] sm:$0xf]
    %v349 = vld [vmem:[%s4 + $0x6c] sm:$0xf]
    %v350 = vld [vmem:[%s4 + $0x70] sm:$0xf]
    %v351 = vld [vmem:[%s4 + $0x74] sm:$0xf]
    %v352 = vld [vmem:[%s4 + $0x78] sm:$0xf]
    %v353 = vld [vmem:[%s4 + $0x7c] sm:$0xf]
    %v354 = vld [vmem:[%s5] sm:$0x1]
    %v356 = vlaneseq
    %v357 = vshrl.u32 %v356, 7
    %v358 = vsub.s32 0, %v357
    %v359 = vrot.slane %v354, %v358
    %v393 = vunpack.c.l.b16 %v322
    %v394 = vunpack.c.l.b16 %v323
    %v395 = vunpack.c.l.b16 %v324
    %v396 = vunpack.c.l.b16 %v325
    %v397 = vunpack.c.l.b16 %v326
    %v398 = vunpack.c.l.b16 %v327
    %v399 = vunpack.c.l.b16 %v328
    %v400 = vunpack.c.l.b16 %v329
    %v401 = vunpack.c.l.b16 %v330
    %v402 = vunpack.c.l.b16 %v331
    %v403 = vunpack.c.l.b16 %v332
    %v404 = vunpack.c.l.b16 %v333
    %v405 = vunpack.c.l.b16 %v334
    %v406 = vunpack.c.l.b16 %v335
    %v407 = vunpack.c.l.b16 %v336
    %v408 = vunpack.c.l.b16 %v337
    %v409 = vunpack.c.l.b16 %v338
    %v410 = vunpack.c.l.b16 %v339
    %v411 = vunpack.c.l.b16 %v340
    %v412 = vunpack.c.l.b16 %v341
    %v413 = vunpack.c.l.b16 %v342
    %v414 = vunpack.c.l.b16 %v343
    %v415 = vunpack.c.l.b16 %v344
    %v416 = vunpack.c.l.b16 %v345
    %v417 = vunpack.c.l.b16 %v346
    %v418 = vunpack.c.l.b16 %v347
    %v419 = vunpack.c.l.b16 %v348
    %v420 = vunpack.c.l.b16 %v349
    %v421 = vunpack.c.l.b16 %v350
    %v422 = vunpack.c.l.b16 %v351
    %v423 = vunpack.c.l.b16 %v352
    %v424 = vunpack.c.l.b16 %v353
    %v425 = vpack.c.b16 %v394, %v393
    %v426 = vpack.c.b16 %v396, %v395
    %v427 = vpack.c.b16 %v398, %v397
    %v428 = vpack.c.b16 %v400, %v399
    %v429 = vpack.c.b16 %v402, %v401
    %v430 = vpack.c.b16 %v404, %v403
    %v431 = vpack.c.b16 %v406, %v405
    %v432 = vpack.c.b16 %v408, %v407
    %v433 = vpack.c.b16 %v410, %v409
    %v434 = vpack.c.b16 %v412, %v411
    %v435 = vpack.c.b16 %v414, %v413
    %v436 = vpack.c.b16 %v416, %v415
    %v437 = vpack.c.b16 %v418, %v417
    %v438 = vpack.c.b16 %v420, %v419
    %v439 = vpack.c.b16 %v422, %v421
    %v440 = vpack.c.b16 %v424, %v423
    %457 = vmatprep.subr.bf16.mxu0 0
    %458 = vmatpush1.bf16.msra.mxu0 %v432
    %459 = vmatprep.subr.bf16.mxu0 0
    %460 = vmatpush1.bf16.msra.mxu0 %v431
    %461 = vmatprep.subr.bf16.mxu0 0
    %462 = vmatpush1.bf16.msra.mxu0 %v430
    %463 = vmatprep.subr.bf16.mxu0 0
    %464 = vmatpush1.bf16.msra.mxu0 %v429
    %465 = vmatprep.subr.bf16.mxu0 0
    %466 = vmatpush1.bf16.msra.mxu0 %v428
    %467 = vmatprep.subr.bf16.mxu0 0
    %468 = vmatpush1.bf16.msra.mxu0 %v427
    %469 = vmatprep.subr.bf16.mxu0 0
    %470 = vmatpush1.bf16.msra.mxu0 %v426
    %471 = vmatprep.subr.bf16.mxu0 0
    %472 = vmatpush1.bf16.msra.mxu0 %v425
    %473 = vmatprep.subr.bf16.mxu0 0
    %474 = vmatpush2.bf16.msra.mxu0 %v440
    %475 = vmatprep.subr.bf16.mxu0 0
    %476 = vmatpush2.bf16.msra.mxu0 %v439
    %477 = vmatprep.subr.bf16.mxu0 0
    %478 = vmatpush2.bf16.msra.mxu0 %v438
    %479 = vmatprep.subr.bf16.mxu0 0
    %480 = vmatpush2.bf16.msra.mxu0 %v437
    %481 = vmatprep.subr.bf16.mxu0 0
    %482 = vmatpush2.bf16.msra.mxu0 %v436
    %483 = vmatprep.subr.bf16.mxu0 0
    %484 = vmatpush2.bf16.msra.mxu0 %v435
    %485 = vmatprep.subr.bf16.mxu0 0
    %486 = vmatpush2.bf16.msra.mxu0 %v434
    %487 = vmatprep.subr.bf16.mxu0 0
    %488 = vmatpush2.bf16.msra.mxu0 %v433
    %489 = vmatprep.mubr.bf16.mxu0 %v321
    %490 = vmatmul.mubr.bf16.gmra.mxu0 %v320
    %v491 = vpop.f32.mrf.mxu0
    %v492 = vadd.f32 %v359, %v491
    %v493 = vpop.f32.mrf.mxu0
    %v494 = vpop.f32.mrf.mxu0
    %v495 = vpop.f32.mrf.mxu0
    %496 = vdwg.mxu0
    %v497 = vmax.f32 %v492, 0.0
    %v498 = vpack.c.bf16 %v497, %v497
    %v499 = vld [vmem:[%s6] sm:$0xf]
    %v500 = vld [vmem:[%s6 + $0x4] sm:$0xf]
    %v501 = vld [vmem:[%s6 + $0x8] sm:$0xf]
    %v502 = vld [vmem:[%s6 + $0xc] sm:$0xf]
    %v503 = vld [vmem:[%s6 + $0x10] sm:$0xf]
    %v504 = vld [vmem:[%s6 + $0x14] sm:$0xf]
    %v505 = vld [vmem:[%s6 + $0x18] sm:$0xf]
    %v506 = vld [vmem:[%s6 + $0x1c] sm:$0xf]
    %v507 = vld [vmem:[%s7] sm:$0x1]
    %v509 = vlaneseq
    %v510 = vshrl.u32 %v509, 7
    %v511 = vsub.s32 0, %v510
    %v512 = vrot.slane %v507, %v511
    %v522 = vunpack.c.l.b16 %v499
    %v523 = vunpack.c.l.b16 %v500
    %v524 = vunpack.c.l.b16 %v501
    %v525 = vunpack.c.l.b16 %v502
    %v526 = vunpack.c.l.b16 %v503
    %v527 = vunpack.c.l.b16 %v504
    %v528 = vunpack.c.l.b16 %v505
    %v529 = vunpack.c.l.b16 %v506
    %v530 = vpack.c.b16 %v523, %v522
    %v531 = vpack.c.b16 %v525, %v524
    %v532 = vpack.c.b16 %v527, %v526
    %v533 = vpack.c.b16 %v529, %v528
    %vm538 = vcmask 523264
    %v540 = vsel %vm538, %v498, 0
    %542 = vmatprep.subr.bf16.mxu0 0
    %543 = vmatpush1.bf16.msra.mxu0 0
    %544 = vmatprep.subr.bf16.mxu0 0
    %545 = vmatpush1.bf16.msra.mxu0 0
    %546 = vmatprep.subr.bf16.mxu0 0
    %547 = vmatpush1.bf16.msra.mxu0 0
    %548 = vmatprep.subr.bf16.mxu0 0
    %549 = vmatpush1.bf16.msra.mxu0 0
    %550 = vmatprep.subr.bf16.mxu0 0
    %551 = vmatpush1.bf16.msra.mxu0 %v533
    %552 = vmatprep.subr.bf16.mxu0 0
    %553 = vmatpush1.bf16.msra.mxu0 %v532
    %554 = vmatprep.subr.bf16.mxu0 0
    %555 = vmatpush1.bf16.msra.mxu0 %v531
    %556 = vmatprep.subr.bf16.mxu0 0
    %557 = vmatpush1.bf16.msra.mxu0 %v530
    %558 = vmatprep.subr.bf16.mxu0 0
    %559 = vmatpush2.bf16.msra.mxu0 0
    %560 = vmatprep.subr.bf16.mxu0 0
    %561 = vmatpush2.bf16.msra.mxu0 0
    %562 = vmatprep.subr.bf16.mxu0 0
    %563 = vmatpush2.bf16.msra.mxu0 0
    %564 = vmatprep.subr.bf16.mxu0 0
    %565 = vmatpush2.bf16.msra.mxu0 0
    %566 = vmatprep.subr.bf16.mxu0 0
    %567 = vmatpush2.bf16.msra.mxu0 0
    %568 = vmatprep.subr.bf16.mxu0 0
    %569 = vmatpush2.bf16.msra.mxu0 0
    %570 = vmatprep.subr.bf16.mxu0 0
    %571 = vmatpush2.bf16.msra.mxu0 0
    %572 = vmatprep.subr.bf16.mxu0 0
    %573 = vmatpush2.bf16.msra.mxu0 0
    %574 = vmatprep.mubr.bf16.mxu0 0
    %575 = vmatmul.mubr.bf16.gmra.mxu0 %v540
    %v576 = vpop.f32.mrf.mxu0
    %v577 = vadd.f32 %v512, %v576
    %v578 = vpop.f32.mrf.mxu0
    %v579 = vpop.f32.mrf.mxu0
    %v580 = vpop.f32.mrf.mxu0
    %581 = vdwg.mxu0
    %v582 = vmul.f32 %v577, 0.5
    %v583 = vmul.f32 %v582, 1.442695
    %v584 = vpow.pop %v583
    %v585 = vld [vmem:[%s1] sm:$0xff]
    %587 = vrot.lane.b32.xlu0 %v584, 120
    %v588 = vpop.permute.xlu0 %587
    %v590 = vmul.f32 %v585, %v588
    %v591 = vadd.f32 %v577, %v590
    %v592 = vpack.c.bf16 %v591, %v591
    %v593 = vld [vmem:[%s8] sm:$0xf]
    %v594 = vld [vmem:[%s9] sm:$0x1]
    %v596 = vlaneseq
    %v597 = vshrl.u32 %v596, 7
    %v598 = vsub.s32 0, %v597
    %v599 = vrot.slane %v594, %v598
    %vm601 = vcmask 64512
    %v603 = vsel %vm601, %v592, 0
    %vm605 = vcmask 1043456
    %v607 = vsel %vm605, %v593, 0
    %609 = vmatprep.subr.bf16.mxu0 0
    %610 = vmatpush1.bf16.msra.mxu0 0
    %611 = vmatprep.subr.bf16.mxu0 0
    %612 = vmatpush1.bf16.msra.mxu0 0
    %613 = vmatprep.subr.bf16.mxu0 0
    %614 = vmatpush1.bf16.msra.mxu0 0
    %615 = vmatprep.subr.bf16.mxu0 0
    %616 = vmatpush1.bf16.msra.mxu0 0
    %617 = vmatprep.subr.bf16.mxu0 0
    %618 = vmatpush1.bf16.msra.mxu0 0
    %619 = vmatprep.subr.bf16.mxu0 0
    %620 = vmatpush1.bf16.msra.mxu0 0
    %621 = vmatprep.subr.bf16.mxu0 0
    %622 = vmatpush1.bf16.msra.mxu0 0
    %623 = vmatprep.subr.bf16.mxu0 0
    %624 = vmatpush1.bf16.msra.mxu0 %v607
    %625 = vmatprep.subr.bf16.mxu0 0
    %626 = vmatpush2.bf16.msra.mxu0 0
    %627 = vmatprep.subr.bf16.mxu0 0
    %628 = vmatpush2.bf16.msra.mxu0 0
    %629 = vmatprep.subr.bf16.mxu0 0
    %630 = vmatpush2.bf16.msra.mxu0 0
    %631 = vmatprep.subr.bf16.mxu0 0
    %632 = vmatpush2.bf16.msra.mxu0 0
    %633 = vmatprep.subr.bf16.mxu0 0
    %634 = vmatpush2.bf16.msra.mxu0 0
    %635 = vmatprep.subr.bf16.mxu0 0
    %636 = vmatpush2.bf16.msra.mxu0 0
    %637 = vmatprep.subr.bf16.mxu0 0
    %638 = vmatpush2.bf16.msra.mxu0 0
    %639 = vmatprep.subr.bf16.mxu0 0
    %640 = vmatpush2.bf16.msra.mxu0 0
    %641 = vmatprep.mubr.bf16.mxu0 0
    %642 = vmatmul.mubr.bf16.gmra.mxu0 %v603
    %v643 = vpop.f32.mrf.mxu0
    %v644 = vadd.f32 %v599, %v643
    %v645 = vpop.f32.mrf.mxu0
    %v646 = vpop.f32.mrf.mxu0
    %v647 = vpop.f32.mrf.mxu0
    %648 = vdwg.mxu0
    %v649 = vmax.f32 %v644, 0.0
    %v650 = vpack.c.bf16 %v649, %v649
    %v651 = vld [vmem:[#allocation2] sm:$0xff]
    %v652 = vld [vmem:[#allocation2 + $0x8] sm:$0xff]
    %v653 = vld [vmem:[#allocation2 + $0x10] sm:$0xff]
    %v654 = vld [vmem:[#allocation2 + $0x18] sm:$0xff]
    %v655 = vld [vmem:[#allocation2 + $0x20] sm:$0xff]
    %v656 = vld [vmem:[#allocation2 + $0x28] sm:$0xff]
    %v657 = vld [vmem:[#allocation2 + $0x30] sm:$0xff]
    %v658 = vld [vmem:[#allocation2 + $0x38] sm:$0xff]
    %v659 = vld [vmem:[%s11] sm:$0x3]
    %v661 = vlaneseq
    %v662 = vshrl.u32 %v661, 7
    %v663 = vsub.s32 0, %v662
    %v664 = vrot.slane %v659, %v663
    %v665 = vlaneseq
    %v666 = vshrl.u32 %v665, 7
    %v667 = vsub.s32 1, %v666
    %v668 = vrot.slane %v659, %v667
    %v679 = vunpack.c.l.b16 %v651
    %v680 = vunpack.c.h.b16 %v651
    %v681 = vunpack.c.l.b16 %v652
    %v682 = vunpack.c.h.b16 %v652
    %v683 = vunpack.c.l.b16 %v653
    %v684 = vunpack.c.h.b16 %v653
    %v685 = vunpack.c.l.b16 %v654
    %v686 = vunpack.c.h.b16 %v654
    %v687 = vunpack.c.l.b16 %v655
    %v688 = vunpack.c.h.b16 %v655
    %v689 = vunpack.c.l.b16 %v656
    %v690 = vunpack.c.h.b16 %v656
    %v691 = vunpack.c.l.b16 %v657
    %v692 = vunpack.c.h.b16 %v657
    %v693 = vunpack.c.l.b16 %v658
    %v694 = vunpack.c.h.b16 %v658
    %v695 = vpack.c.b16 %v681, %v679
    %v696 = vpack.c.b16 %v682, %v680
    %v697 = vpack.c.b16 %v685, %v683
    %v698 = vpack.c.b16 %v686, %v684
    %v699 = vpack.c.b16 %v689, %v687
    %v700 = vpack.c.b16 %v690, %v688
    %v701 = vpack.c.b16 %v693, %v691
    %v702 = vpack.c.b16 %v694, %v692
    %v712 = vsel %vm538, %v650, 0
    %714 = vmatprep.subr.bf16.mxu0 0
    %715 = vmatpush1.bf16.msra.mxu0 0
    %716 = vmatprep.subr.bf16.mxu0 0
    %717 = vmatpush1.bf16.msra.mxu0 0
    %718 = vmatprep.subr.bf16.mxu0 0
    %719 = vmatpush1.bf16.msra.mxu0 0
    %720 = vmatprep.subr.bf16.mxu0 0
    %721 = vmatpush1.bf16.msra.mxu0 0
    %722 = vmatprep.subr.bf16.mxu0 %v702
    %723 = vmatpush1.bf16.msra.mxu0 %v701
    %724 = vmatprep.subr.bf16.mxu0 %v700
    %725 = vmatpush1.bf16.msra.mxu0 %v699
    %726 = vmatprep.subr.bf16.mxu0 %v698
    %727 = vmatpush1.bf16.msra.mxu0 %v697
    %728 = vmatprep.subr.bf16.mxu0 %v696
    %729 = vmatpush1.bf16.msra.mxu0 %v695
    %730 = vmatprep.subr.bf16.mxu0 0
    %731 = vmatpush2.bf16.msra.mxu0 0
    %732 = vmatprep.subr.bf16.mxu0 0
    %733 = vmatpush2.bf16.msra.mxu0 0
    %734 = vmatprep.subr.bf16.mxu0 0
    %735 = vmatpush2.bf16.msra.mxu0 0
    %736 = vmatprep.subr.bf16.mxu0 0
    %737 = vmatpush2.bf16.msra.mxu0 0
    %738 = vmatprep.subr.bf16.mxu0 0
    %739 = vmatpush2.bf16.msra.mxu0 0
    %740 = vmatprep.subr.bf16.mxu0 0
    %741 = vmatpush2.bf16.msra.mxu0 0
    %742 = vmatprep.subr.bf16.mxu0 0
    %743 = vmatpush2.bf16.msra.mxu0 0
    %744 = vmatprep.subr.bf16.mxu0 0
    %745 = vmatpush2.bf16.msra.mxu0 0
    %746 = vmatprep.mubr.bf16.mxu0 0
    %747 = vmatmul.mubr.bf16.gmra.mxu0 %v712
    %v748 = vpop.f32.mrf.mxu0
    %v749 = vadd.f32 %v664, %v748
    %v750 = vpop.f32.mrf.mxu0
    %v751 = vadd.f32 %v668, %v750
    %v752 = vpop.f32.mrf.mxu0
    %v753 = vpop.f32.mrf.mxu0
    %754 = vdwg.mxu0
    %v755 = vmax.f32 %v749, 0.0
    %v756 = vmax.f32 %v751, 0.0
    %v757 = vpack.c.bf16 %v755, %v755
    %v758 = vpack.c.bf16 %v756, %v756
    %v759 = vld [vmem:[%s12] sm:$0xff]
    %v760 = vld [vmem:[%s12 + $0x8] sm:$0xff]
    %v761 = vld [vmem:[%s12 + $0x10] sm:$0xff]
    %v762 = vld [vmem:[%s12 + $0x18] sm:$0xff]
    %v763 = vld [vmem:[%s12 + $0x20] sm:$0xff]
    %v764 = vld [vmem:[%s12 + $0x28] sm:$0xff]
    %v765 = vld [vmem:[%s12 + $0x30] sm:$0xff]
    %v766 = vld [vmem:[%s12 + $0x38] sm:$0xff]
    %v767 = vld [vmem:[%s12 + $0x40] sm:$0xff]
    %v768 = vld [vmem:[%s12 + $0x48] sm:$0xff]
    %v769 = vld [vmem:[%s12 + $0x50] sm:$0xff]
    %v770 = vld [vmem:[%s12 + $0x58] sm:$0xff]
    %v771 = vld [vmem:[%s12 + $0x60] sm:$0xff]
    %v772 = vld [vmem:[%s12 + $0x68] sm:$0xff]
    %v773 = vld [vmem:[%s12 + $0x70] sm:$0xff]
    %v774 = vld [vmem:[%s12 + $0x78] sm:$0xff]
    %v775 = vld [vmem:[%s12 + $0x80] sm:$0xff]
    %v776 = vld [vmem:[%s12 + $0x88] sm:$0xff]
    %v777 = vld [vmem:[%s12 + $0x90] sm:$0xff]
    %v778 = vld [vmem:[%s12 + $0x98] sm:$0xff]
    %v779 = vld [vmem:[%s12 + $0xa0] sm:$0xff]
    %v780 = vld [vmem:[%s12 + $0xa8] sm:$0xff]
    %v781 = vld [vmem:[%s12 + $0xb0] sm:$0xff]
    %v782 = vld [vmem:[%s12 + $0xb8] sm:$0xff]
    %v783 = vld [vmem:[%s12 + $0xc0] sm:$0xff]
    %v784 = vld [vmem:[%s12 + $0xc8] sm:$0xff]
    %v785 = vld [vmem:[%s12 + $0xd0] sm:$0xff]
    %v786 = vld [vmem:[%s12 + $0xd8] sm:$0xff]
    %v787 = vld [vmem:[%s12 + $0xe0] sm:$0xff]
    %v788 = vld [vmem:[%s12 + $0xe8] sm:$0xff]
    %v789 = vld [vmem:[%s12 + $0xf0] sm:$0xff]
    %v790 = vld [vmem:[%s12 + $0xf8] sm:$0xff]
    %v791 = vld [vmem:[%s13] sm:$0x3]
    %v793 = vlaneseq
    %v794 = vshrl.u32 %v793, 7
    %v795 = vsub.s32 0, %v794
    %v796 = vrot.slane %v791, %v795
    %v797 = vlaneseq
    %v798 = vshrl.u32 %v797, 7
    %v799 = vsub.s32 1, %v798
    %v800 = vrot.slane %v791, %v799
    %v835 = vunpack.c.l.b16 %v759
    %v836 = vunpack.c.h.b16 %v759
    %v837 = vunpack.c.l.b16 %v760
    %v838 = vunpack.c.h.b16 %v760
    %v839 = vunpack.c.l.b16 %v761
    %v840 = vunpack.c.h.b16 %v761
    %v841 = vunpack.c.l.b16 %v762
    %v842 = vunpack.c.h.b16 %v762
    %v843 = vunpack.c.l.b16 %v763
    %v844 = vunpack.c.h.b16 %v763
    %v845 = vunpack.c.l.b16 %v764
    %v846 = vunpack.c.h.b16 %v764
    %v847 = vunpack.c.l.b16 %v765
    %v848 = vunpack.c.h.b16 %v765
    %v849 = vunpack.c.l.b16 %v766
    %v850 = vunpack.c.h.b16 %v766
    %v851 = vunpack.c.l.b16 %v767
    %v852 = vunpack.c.h.b16 %v767
    %v853 = vunpack.c.l.b16 %v768
    %v854 = vunpack.c.h.b16 %v768
    %v855 = vunpack.c.l.b16 %v769
    %v856 = vunpack.c.h.b16 %v769
    %v857 = vunpack.c.l.b16 %v770
    %v858 = vunpack.c.h.b16 %v770
    %v859 = vunpack.c.l.b16 %v771
    %v860 = vunpack.c.h.b16 %v771
    %v861 = vunpack.c.l.b16 %v772
    %v862 = vunpack.c.h.b16 %v772
    %v863 = vunpack.c.l.b16 %v773
    %v864 = vunpack.c.h.b16 %v773
    %v865 = vunpack.c.l.b16 %v774
    %v866 = vunpack.c.h.b16 %v774
    %v867 = vunpack.c.l.b16 %v775
    %v868 = vunpack.c.h.b16 %v775
    %v869 = vunpack.c.l.b16 %v776
    %v870 = vunpack.c.h.b16 %v776
    %v871 = vunpack.c.l.b16 %v777
    %v872 = vunpack.c.h.b16 %v777
    %v873 = vunpack.c.l.b16 %v778
    %v874 = vunpack.c.h.b16 %v778
    %v875 = vunpack.c.l.b16 %v779
    %v876 = vunpack.c.h.b16 %v779
    %v877 = vunpack.c.l.b16 %v780
    %v878 = vunpack.c.h.b16 %v780
    %v879 = vunpack.c.l.b16 %v781
    %v880 = vunpack.c.h.b16 %v781
    %v881 = vunpack.c.l.b16 %v782
    %v882 = vunpack.c.h.b16 %v782
    %v883 = vunpack.c.l.b16 %v783
    %v884 = vunpack.c.h.b16 %v783
    %v885 = vunpack.c.l.b16 %v784
    %v886 = vunpack.c.h.b16 %v784
    %v887 = vunpack.c.l.b16 %v785
    %v888 = vunpack.c.h.b16 %v785
    %v889 = vunpack.c.l.b16 %v786
    %v890 = vunpack.c.h.b16 %v786
    %v891 = vunpack.c.l.b16 %v787
    %v892 = vunpack.c.h.b16 %v787
    %v893 = vunpack.c.l.b16 %v788
    %v894 = vunpack.c.h.b16 %v788
    %v895 = vunpack.c.l.b16 %v789
    %v896 = vunpack.c.h.b16 %v789
    %v897 = vunpack.c.l.b16 %v790
    %v898 = vunpack.c.h.b16 %v790
    %v899 = vpack.c.b16 %v837, %v835
    %v900 = vpack.c.b16 %v838, %v836
    %v901 = vpack.c.b16 %v841, %v839
    %v902 = vpack.c.b16 %v842, %v840
    %v903 = vpack.c.b16 %v845, %v843
    %v904 = vpack.c.b16 %v846, %v844
    %v905 = vpack.c.b16 %v849, %v847
    %v906 = vpack.c.b16 %v850, %v848
    %v907 = vpack.c.b16 %v853, %v851
    %v908 = vpack.c.b16 %v854, %v852
    %v909 = vpack.c.b16 %v857, %v855
    %v910 = vpack.c.b16 %v858, %v856
    %v911 = vpack.c.b16 %v861, %v859
    %v912 = vpack.c.b16 %v862, %v860
    %v913 = vpack.c.b16 %v865, %v863
    %v914 = vpack.c.b16 %v866, %v864
    %v915 = vpack.c.b16 %v869, %v867
    %v916 = vpack.c.b16 %v870, %v868
    %v917 = vpack.c.b16 %v873, %v871
    %v918 = vpack.c.b16 %v874, %v872
    %v919 = vpack.c.b16 %v877, %v875
    %v920 = vpack.c.b16 %v878, %v876
    %v921 = vpack.c.b16 %v881, %v879
    %v922 = vpack.c.b16 %v882, %v880
    %v923 = vpack.c.b16 %v885, %v883
    %v924 = vpack.c.b16 %v886, %v884
    %v925 = vpack.c.b16 %v889, %v887
    %v926 = vpack.c.b16 %v890, %v888
    %v927 = vpack.c.b16 %v893, %v891
    %v928 = vpack.c.b16 %v894, %v892
    %v929 = vpack.c.b16 %v897, %v895
    %v930 = vpack.c.b16 %v898, %v896
    %963 = vmatprep.subr.bf16.mxu0 %v914
    %964 = vmatpush1.bf16.msra.mxu0 %v913
    %965 = vmatprep.subr.bf16.mxu0 %v912
    %966 = vmatpush1.bf16.msra.mxu0 %v911
    %967 = vmatprep.subr.bf16.mxu0 %v910
    %968 = vmatpush1.bf16.msra.mxu0 %v909
    %969 = vmatprep.subr.bf16.mxu0 %v908
    %970 = vmatpush1.bf16.msra.mxu0 %v907
    %971 = vmatprep.subr.bf16.mxu0 %v906
    %972 = vmatpush1.bf16.msra.mxu0 %v905
    %973 = vmatprep.subr.bf16.mxu0 %v904
    %974 = vmatpush1.bf16.msra.mxu0 %v903
    %975 = vmatprep.subr.bf16.mxu0 %v902
    %976 = vmatpush1.bf16.msra.mxu0 %v901
    %977 = vmatprep.subr.bf16.mxu0 %v900
    %978 = vmatpush1.bf16.msra.mxu0 %v899
    %979 = vmatprep.subr.bf16.mxu0 %v930
    %980 = vmatpush2.bf16.msra.mxu0 %v929
    %981 = vmatprep.subr.bf16.mxu0 %v928
    %982 = vmatpush2.bf16.msra.mxu0 %v927
    %983 = vmatprep.subr.bf16.mxu0 %v926
    %984 = vmatpush2.bf16.msra.mxu0 %v925
    %985 = vmatprep.subr.bf16.mxu0 %v924
    %986 = vmatpush2.bf16.msra.mxu0 %v923
    %987 = vmatprep.subr.bf16.mxu0 %v922
    %988 = vmatpush2.bf16.msra.mxu0 %v921
    %989 = vmatprep.subr.bf16.mxu0 %v920
    %990 = vmatpush2.bf16.msra.mxu0 %v919
    %991 = vmatprep.subr.bf16.mxu0 %v918
    %992 = vmatpush2.bf16.msra.mxu0 %v917
    %993 = vmatprep.subr.bf16.mxu0 %v916
    %994 = vmatpush2.bf16.msra.mxu0 %v915
    %995 = vmatprep.mubr.bf16.mxu0 %v758
    %996 = vmatmul.mubr.bf16.gmra.mxu0 %v757
    %v997 = vpop.f32.mrf.mxu0
    %v998 = vadd.f32 %v796, %v997
    %v999 = vpop.f32.mrf.mxu0
    %v1000 = vadd.f32 %v800, %v999
    %v1001 = vpop.f32.mrf.mxu0
    %v1002 = vpop.f32.mrf.mxu0
    %1003 = vdwg.mxu0
    %v1004 = vxor.u32 %v998, 2147483648
    %v1005 = vxor.u32 %v1000, 2147483648
    %v1006 = vmul.f32 %v1004, 1.442695
    %v1007 = vpow.pop %v1006
    %v1008 = vmul.f32 %v1005, 1.442695
    %v1009 = vpow.pop %v1008
    %v1010 = vadd.f32 %v1007, 1.0
    %v1011 = vadd.f32 %v1009, 1.0
    %v1012 = vrcp.pop %v1010
    %v1013 = vmul.f32 1.0, %v1012
    %v1014 = vrcp.pop %v1011
    %v1015 = vmul.f32 1.0, %v1014
    %1016 = vst [vmem:[#allocation5] sm:$0xff] %v1013
    %1017 = vst [vmem:[#allocation5 + $0x8] sm:$0xff] %v1015
    %vm1018 = vcmask 130048
    %1019 = vst.msk [vmem:[%s15] sm:$0xff] %vm1018, %v577
    // Predicated region
    $region62: #{vae_forward.1} parent=1 // pred_check
      _
    $region63: #{vae_forward.1} parent=1 // pred_check_branch
      %1021 = sbr.rel (0) target = $region65
    $region64: #{vae_forward.1} parent=1 // pred_region
      %s1023 = ssub.s32 256, 256
      %1024 = vsyncadd [#allocation4], %s1023
      %s1026 = sshll.u32 [#allocation5], 4
      %s1027 = int_to_ptr.vmem [resolvable:$true] %s1026
      %1029 = dma.vmem_to_hbm [thread:$0]  %s1027, 256, %s14, [#allocation4]
    $region65: #{vae_forward.1} parent=1 // pred_fallthru
      _
    // Predicated region
    $region66: #{vae_forward.1} parent=1 // pred_check
      _
    $region67: #{vae_forward.1} parent=1 // pred_check_branch
      %1031 = sbr.rel (0) target = $region69
    $region68: #{vae_forward.1} parent=1 // pred_region
      _
    $region69: #{vae_forward.1} parent=1 // pred_fallthru
      _
    // Predicated region
    $region70: #{vae_forward.1} parent=1 // pred_check
      _
    $region71: #{vae_forward.1} parent=1 // pred_check_branch
      %1033 = sbr.rel (0) target = $region73
    $region72: #{vae_forward.1} parent=1 // pred_region
      %1034 = dma.done [#allocation4], 256
    $region73: #{vae_forward.1} parent=1 // pred_fallthru
      _
    // Predicated region
    $region74: #{vae_forward.1} parent=1 // pred_check
      _
    $region75: #{vae_forward.1} parent=1 // pred_check_branch
      %1036 = sbr.rel (0) target = $region77
    $region76: #{vae_forward.1} parent=1 // pred_region
      _
    $region77: #{vae_forward.1} parent=1 // pred_fallthru
      _
    %1037 = vsyncpa [#allocation3], 1
    %1038 = vsyncpa [#allocation4], 1

</llo_original>
